<compile_context>
chip_gen: v5e
topology: v5e:2x2
jax: 0.10.0
libtpu: 0.0.40
codegen_flags: <defaults>
</compile_context>

<pallas_src>
import jax
import jax.numpy as jnp
from jax.experimental import pallas as pl
from jax.experimental.pallas import tpu as pltpu


LANES = 128                    # TPU vreg lane width
SMALL_BATCH_XLA_CUTOFF = 4096  # below this, XLA's fused path beats a kernel launch


def _round_up(x, m):
    return ((x + m - 1) // m) * m


def _round_down(x, m):
    return (x // m) * m


def _x_tile_byte_target():
    """Per-grid-step streaming granularity, generation aware.

    v7x (~3.2 TB/s HBM): 1 MiB/step is only ~0.33 us of DMA vs ~0.35 us of
    per-step pipeline overhead, so use ~4 MiB tiles (~80-90% of roofline).
    v5e/v6e (~0.8-1.4 TB/s): ~2 MiB tiles already reach ~90% of roofline.
    """
    try:
        kind = jax.devices()[0].device_kind.lower()
    except Exception:
        kind = ""
    if "7" in kind:            # v7x
        return 4 * 1024 * 1024
    return 2 * 1024 * 1024     # v5e / v6e / unknown


def mapper_kernel(x_ref, w1_ref, b1_ref, w2_ref, b2_ref, o_ref):
    """One batch tile of the packed 2-layer MLP.

    x_ref : (TB, 128)   8 samples packed side-by-side on the lane axis
    w*_ref: (128, 128)  block-diagonal (8 copies of the 16x16 weight)
    b*_ref: (1, 128)    bias tiled 8x
    """
    # Layer 1: Linear + ReLU (MXU matmul with f32 accumulation, VPU elementwise)
    h = jnp.dot(x_ref[...], w1_ref[...], preferred_element_type=jnp.float32)
    h = jnp.maximum(h + b1_ref[...].astype(jnp.float32), 0.0)
    # Layer 2: Linear (no activation -- last layer)
    y = jnp.dot(h.astype(w2_ref.dtype), w2_ref[...],
                preferred_element_type=jnp.float32)
    y = y + b2_ref[...].astype(jnp.float32)
    o_ref[...] = y.astype(o_ref.dtype)


def mapper_forward_pallas(x, w1, b1, w2, b2, *, compute_dtype=None,
                          out_dtype=None):
    """Pallas forward: y = relu(x @ w1 + b1) @ w2 + b2.

    x: (B, 16); w1, w2: (16, 16) stored (in, out); b1, b2: (16,).
    compute_dtype: dtype used for HBM I/O and MXU inputs (f32 accumulation is
      always used inside each layer).  Pass jnp.bfloat16 (ideally with a bf16
      x from the producer) to halve HBM traffic.
    out_dtype: output dtype; defaults to compute_dtype (true bf16 I/O on both
      sides when compute_dtype=bf16).
    """
    B, F = x.shape
    assert w1.shape == (F, F) and w2.shape == (F, F)
    assert b1.shape == (F,) and b2.shape == (F,)
    assert LANES % F == 0, "feature width must divide 128 for lane packing"
    pack = LANES // F                       # samples per 128-lane row (8 for F=16)

    dt = jnp.dtype(compute_dtype) if compute_dtype is not None else x.dtype
    out_dt = jnp.dtype(out_dtype) if out_dtype is not None else dt

    # Sublane granularity of one vreg tile for this dtype (f32:8, bf16:16, int8:32).
    row_mult = {4: 8, 2: 16, 1: 32}[dt.itemsize]

    # ---- lane-dense repacking (no whole-array padding passes) --------------
    m = pl.cdiv(B, pack)                    # packed 128-lane rows
    b_pack = m * pack

    if x.dtype != dt:
        # Fallback cast: costs one extra HBM pass.  For peak bandwidth the
        # caller should already supply x in compute_dtype.
        x = x.astype(dt)
    if b_pack != B:
        x = jnp.pad(x, ((0, b_pack - B), (0, 0)))   # only for ragged B
    x_packed = x.reshape(m, LANES)                  # contiguous -> free view

    # Block-diagonal weights / tiled biases (tiny 128x128 host-side prep; in a
    # real model these would be precomputed once and reused across calls).
    eye = jnp.eye(pack, dtype=dt)
    w1_bd = jnp.kron(eye, w1.astype(dt))            # (128, 128)
    w2_bd = jnp.kron(eye, w2.astype(dt))
    b1_t = jnp.tile(b1.astype(dt), pack).reshape(1, LANES)
    b2_t = jnp.tile(b2.astype(dt), pack).reshape(1, LANES)

    # ---- batch tiling -------------------------------------------------------
    # Max tile from the per-step byte target; cap so the grid has >=2 steps
    # whenever possible (v7x megacore) and never exceeds the array.
    tb_max = max(row_mult,
                 _round_down(_x_tile_byte_target() // (LANES * dt.itemsize),
                             row_mult))
    tb = min(tb_max, _round_up(pl.cdiv(m, 2), row_mult), m)
    grid = (pl.cdiv(m, tb),)   # ragged last tile handled by boundary masking

    # VMEM budget: double-buffered in/out tiles + resident weights/biases.
    vmem_need = (
        2 * tb * LANES * dt.itemsize          # x tile (double-buffered)
        + 2 * tb * LANES * out_dt.itemsize    # out tile (double-buffered)
        + 2 * (2 * LANES * LANES + 2 * LANES) * dt.itemsize   # weights + biases
    )
    vmem_limit = max(16 * 1024 * 1024,
                     _round_up(vmem_need + 2 * 1024 * 1024, 1024 * 1024))

    # Advisory cost: useful (non-block-diagonal) flops, real HBM traffic.
    flops = 2 * 2 * B * F * F
    bytes_accessed = (
        B * F * dt.itemsize                  # x read
        + B * F * out_dt.itemsize            # y write
        + 2 * F * F * dt.itemsize            # weights
        + 2 * F * dt.itemsize                # biases
    )

    out_packed = pl.pallas_call(
        mapper_kernel,
        out_shape=jax.ShapeDtypeStruct((m, LANES), out_dt),
        grid_spec=pltpu.PrefetchScalarGridSpec(
            num_scalar_prefetch=0,
            grid=grid,
            in_specs=[
                pl.BlockSpec((tb, LANES), lambda i: (i, 0)),       # x tile
                pl.BlockSpec((LANES, LANES), lambda i: (0, 0)),    # w1 (resident)
                pl.BlockSpec((1, LANES), lambda i: (0, 0)),        # b1 (resident)
                pl.BlockSpec((LANES, LANES), lambda i: (0, 0)),    # w2 (resident)
                pl.BlockSpec((1, LANES), lambda i: (0, 0)),        # b2 (resident)
            ],
            out_specs=pl.BlockSpec((tb, LANES), lambda i: (i, 0)),
        ),
        compiler_params=pltpu.CompilerParams(
            # Batch tiles are independent -> megacore-shardable on v7x.
            dimension_semantics=("parallel",),
            vmem_limit_bytes=vmem_limit,
        ),
        cost_estimate=pl.CostEstimate(
            flops=flops, transcendentals=0, bytes_accessed=bytes_accessed),
    )(x_packed, w1_bd, b1_t, w2_bd, b2_t)

    out = out_packed.reshape(b_pack, F)      # free view
    if b_pack != B:
        out = out[:B]
    return out


@jax.jit
def _xla_forward(x, w1, b1, w2, b2):
    h = jnp.maximum(x @ w1 + b1, 0.0)
    return h @ w2 + b2


def mapper_forward(x, w1, b1, w2, b2, *, compute_dtype=None, out_dtype=None,
                   force_pallas=False):
    """Dispatch: small batches go to XLA's fused path (kernel launch overhead
    dominates there); large batches (or force_pallas=True) use the Pallas
    kernel.  For HBM-bound large batches pass compute_dtype=jnp.bfloat16
    (ideally with bf16 inputs) to halve HBM traffic on both sides."""
    B = x.shape[0]
    if not force_pallas and B < SMALL_BATCH_XLA_CUTOFF:
        return _xla_forward(x, w1, b1, w2, b2)
    return mapper_forward_pallas(x, w1, b1, w2, b2,
                                 compute_dtype=compute_dtype,
                                 out_dtype=out_dtype)


def reference_forward(x, w1, b1, w2, b2):
    h = jnp.maximum(x @ w1 + b1, 0.0)
    return h @ w2 + b2


if __name__ == "__main__":
    key = jax.random.PRNGKey(0)
    k_x, k_w1, k_b1, k_w2, k_b2 = jax.random.split(key, 5)

    B = 32          # small demo batch
    H = 16          # h_sizes = [16, 16, 16]

    x = jax.random.normal(k_x, (B, H), dtype=jnp.float32)
    bound = 1.0 / (H ** 0.5)
    w1 = jax.random.uniform(k_w1, (H, H), jnp.float32, -bound, bound)
    b1 = jax.random.uniform(k_b1, (H,), jnp.float32, -bound, bound)
    w2 = jax.random.uniform(k_w2, (H, H), jnp.float32, -bound, bound)
    b2 = jax.random.uniform(k_b2, (H,), jnp.float32, -bound, bound)

    ref = reference_forward(x, w1, b1, w2, b2)

    # f32 Pallas path (forced, so the kernel actually runs at this small batch).
    out = jax.block_until_ready(
        mapper_forward(x, w1, b1, w2, b2, force_pallas=True))
    assert out.shape == (B, H)
    assert jnp.allclose(out, ref, atol=1e-5, rtol=1e-5), "f32 mismatch vs reference"

    # Ragged batch (not a multiple of the 8-sample pack) exercises pad/unpack.
    out5 = jax.block_until_ready(
        mapper_forward(x[:5], w1, b1, w2, b2, force_pallas=True))
    assert out5.shape == (5, H)
    assert jnp.allclose(out5, ref[:5], atol=1e-5, rtol=1e-5), "ragged mismatch"

    # Multi-step grid with a masked (partial) last tile: B=160 -> 20 packed
    # rows -> tb=16 -> grid=(2,), second tile only 4 valid rows.
    x_big = jax.random.normal(k_x, (160, H), dtype=jnp.float32)
    ref_big = reference_forward(x_big, w1, b1, w2, b2)
    out_big = jax.block_until_ready(
        mapper_forward(x_big, w1, b1, w2, b2, force_pallas=True))
    assert out_big.shape == (160, H)
    assert jnp.allclose(out_big, ref_big, atol=1e-5, rtol=1e-5), "multi-tile mismatch"

    # bf16-I/O path (the bandwidth optimization used for large batches):
    # bf16 input, bf16 compute, bf16 output.
    x_bf16 = x.astype(jnp.bfloat16)
    out_bf16 = jax.block_until_ready(
        mapper_forward(x_bf16, w1, b1, w2, b2, compute_dtype=jnp.bfloat16,
                       force_pallas=True))
    assert out_bf16.dtype == jnp.bfloat16
    assert jnp.allclose(out_bf16.astype(jnp.float32), ref,
                        atol=1e-1, rtol=1e-1), "bf16 mismatch"

    print("KERNEL_OK")
</pallas_src>

<mosaic_0001>
module attributes {stable_mosaic.version = 11 : i64} {
  func.func @mapper_kernel(%arg0: i32, %arg1: memref<4x128xf32, #tpu.memory_space<vmem>>, %arg2: memref<128x128xf32, #tpu.memory_space<vmem>>, %arg3: memref<1x128xf32, #tpu.memory_space<vmem>>, %arg4: memref<128x128xf32, #tpu.memory_space<vmem>>, %arg5: memref<1x128xf32, #tpu.memory_space<vmem>>, %arg6: memref<4x128xf32, #tpu.memory_space<vmem>>) attributes {dimension_semantics = [#tpu.dimension_semantics<parallel>], iteration_bounds = array<i64: 1>, scalar_prefetch = 0 : i64, scratch_operands = 0 : i64, tpu.core_type = #tpu.core_type<tc>, window_params = [{transform_indices = @transform_0, window_bounds = array<i64: 4, 128>}, {pipeline_mode = #tpu.pipeline_mode<synchronous>, transform_indices = @transform_1, window_bounds = array<i64: 128, 128>}, {pipeline_mode = #tpu.pipeline_mode<synchronous>, transform_indices = @transform_2, window_bounds = array<i64: 1, 128>}, {pipeline_mode = #tpu.pipeline_mode<synchronous>, transform_indices = @transform_3, window_bounds = array<i64: 128, 128>}, {pipeline_mode = #tpu.pipeline_mode<synchronous>, transform_indices = @transform_4, window_bounds = array<i64: 1, 128>}, {transform_indices = @transform_5, window_bounds = array<i64: 4, 128>}]} {
    %c0 = arith.constant 0 : index
    %c0_0 = arith.constant 0 : index
    %0 = vector.load %arg1[%c0, %c0_0] : memref<4x128xf32, #tpu.memory_space<vmem>>, vector<4x128xf32>
    %c0_1 = arith.constant 0 : index
    %c0_2 = arith.constant 0 : index
    %1 = vector.load %arg2[%c0_1, %c0_2] : memref<128x128xf32, #tpu.memory_space<vmem>>, vector<128x128xf32>
    %cst = arith.constant dense<0.000000e+00> : vector<4x128xf32>
    %2 = tpu.matmul %0, %1, %cst {dimension_numbers = #tpu.dot_dimension_numbers<[1], [0], [0], [1], [0, 0, 1, 1], [], []>} : vector<4x128xf32>, vector<128x128xf32>, vector<4x128xf32> -> vector<4x128xf32>
    %c0_3 = arith.constant 0 : index
    %c0_4 = arith.constant 0 : index
    %3 = vector.load %arg3[%c0_3, %c0_4] : memref<1x128xf32, #tpu.memory_space<vmem>>, vector<1x128xf32>
    %4 = vector.broadcast %3 : vector<1x128xf32> to vector<4x128xf32>
    %5 = arith.addf %2, %4 : vector<4x128xf32>
    %cst_5 = arith.constant 0.000000e+00 : f32
    %6 = vector.broadcast %cst_5 : f32 to vector<4x128xf32>
    %7 = arith.maximumf %5, %6 : vector<4x128xf32>
    %c0_6 = arith.constant 0 : index
    %c0_7 = arith.constant 0 : index
    %8 = vector.load %arg4[%c0_6, %c0_7] : memref<128x128xf32, #tpu.memory_space<vmem>>, vector<128x128xf32>
    %cst_8 = arith.constant dense<0.000000e+00> : vector<4x128xf32>
    %9 = tpu.matmul %7, %8, %cst_8 {dimension_numbers = #tpu.dot_dimension_numbers<[1], [0], [0], [1], [0, 0, 1, 1], [], []>} : vector<4x128xf32>, vector<128x128xf32>, vector<4x128xf32> -> vector<4x128xf32>
    %c0_9 = arith.constant 0 : index
    %c0_10 = arith.constant 0 : index
    %10 = vector.load %arg5[%c0_9, %c0_10] : memref<1x128xf32, #tpu.memory_space<vmem>>, vector<1x128xf32>
    %11 = vector.broadcast %10 : vector<1x128xf32> to vector<4x128xf32>
    %12 = arith.addf %9, %11 : vector<4x128xf32>
    %c0_11 = arith.constant 0 : index
    %c0_12 = arith.constant 0 : index
    %13 = vector.load %arg6[%c0_11, %c0_12] : memref<4x128xf32, #tpu.memory_space<vmem>>, vector<4x128xf32>
    tpu.vector_store %arg6[%c0_11, %c0_12], %12 {strides = array<i32>} : memref<4x128xf32, #tpu.memory_space<vmem>>, vector<4x128xf32>,
    return
  }
  func.func @transform_0(%arg0: i32) -> (i32, i32) {
    %c0_i32 = arith.constant 0 : i32
    %c0_i32_0 = arith.constant 0 : i32
    return %arg0, %c0_i32 : i32, i32
  }
  func.func @transform_1(%arg0: i32) -> (i32, i32) {
    %c0_i32 = arith.constant 0 : i32
    %c0_i32_0 = arith.constant 0 : i32
    %c0_i32_1 = arith.constant 0 : i32
    return %c0_i32, %c0_i32_0 : i32, i32
  }
  func.func @transform_2(%arg0: i32) -> (i32, i32) {
    %c0_i32 = arith.constant 0 : i32
    %c0_i32_0 = arith.constant 0 : i32
    %c0_i32_1 = arith.constant 0 : i32
    return %c0_i32, %c0_i32_0 : i32, i32
  }
  func.func @transform_3(%arg0: i32) -> (i32, i32) {
    %c0_i32 = arith.constant 0 : i32
    %c0_i32_0 = arith.constant 0 : i32
    %c0_i32_1 = arith.constant 0 : i32
    return %c0_i32, %c0_i32_0 : i32, i32
  }
  func.func @transform_4(%arg0: i32) -> (i32, i32) {
    %c0_i32 = arith.constant 0 : i32
    %c0_i32_0 = arith.constant 0 : i32
    %c0_i32_1 = arith.constant 0 : i32
    return %c0_i32, %c0_i32_0 : i32, i32
  }
  func.func @transform_5(%arg0: i32) -> (i32, i32) {
    %c0_i32 = arith.constant 0 : i32
    %c0_i32_0 = arith.constant 0 : i32
    return %arg0, %c0_i32 : i32, i32
  }
}

</mosaic_0001>

<llo_original>
// kernel: tpu_custom_call.1
$region0: #{tpu_custom_call.1}
  #allocation0 [shape = 'u32[]', space=smem, size = 0x4, offset = 0x4, fixed_abs, tag = 'smem constant byte address 0x4 - core index']
  #allocation1 [shape = 'u32[72,128]{1,0:T(1,128)}', space=vmem, size = 0x9000, scoped, tag = 'internal scratch']
  %s0 = inlined_call_operand.hbm [shape: f32[4,128], index: 0, kind: input, shape index: {}]
  %s1 = inlined_call_operand.hbm [shape: f32[128,128], index: 1, kind: input, shape index: {}]
  %s2 = inlined_call_operand.vmem [shape: f32[1,128], index: 2, kind: input, shape index: {}]
  %s3 = inlined_call_operand.hbm [shape: f32[128,128], index: 3, kind: input, shape index: {}]
  %s4 = inlined_call_operand.vmem [shape: f32[1,128], index: 4, kind: input, shape index: {}]
  %s5 = inlined_call_operand.hbm [shape: f32[4,128], index: 5, kind: output, shape index: {}]
  %s6 = sld [smem:[#allocation0]]
  $region42: #{tpu_custom_call.1} parent=0
    _
  %s8 = ssub.s32 1, %s6
  %s9 = scalar_select 0, %s8, %s6
  $region1: #{tpu_custom_call.1} parent=0
    #allocation2 [shape = 'u8[2048]{0}', space=vmem, size = 0x800, scoped, tag = 'input window, operand 0, single buffered']
    #allocation3 [shape = 's32[1]{0}', space=sflag, size = 0x4, scoped, tag = 'scoped memory for tpu_custom_call.1']
    #allocation4 [shape = 's32[1]{0}', space=sflag, size = 0x4, scoped, tag = 'scoped memory for tpu_custom_call.1']
    #allocation5 [shape = 'u8[65536]{0}', space=vmem, size = 0x10000, scoped, tag = 'input window, operand 1, single buffered']
    #allocation6 [shape = 's32[1]{0}', space=sflag, size = 0x4, scoped, tag = 'scoped memory for tpu_custom_call.1']
    #allocation7 [shape = 'u8[65536]{0}', space=vmem, size = 0x10000, scoped, tag = 'input window, operand 3, single buffered']
    #allocation8 [shape = 'u8[2048]{0}', space=vmem, size = 0x800, scoped, tag = 'output window, operand 0, single buffered']
    %10 = vsyncpa [#allocation3], 0
    %11 = vsyncpa [#allocation6], 0
    %12 = vsyncpa [#allocation4], 0
    // Predicated region
    $region2: #{tpu_custom_call.1} parent=1 // pred_check
      _
    $region3: #{tpu_custom_call.1} parent=1 // pred_check_branch
      %14 = sbr.rel (0) target = $region5
    $region4: #{tpu_custom_call.1} parent=1 // pred_region
      %16 = vsyncadd [#allocation3], 0
      %s18 = sshll.u32 %s0, 4
      %s19 = int_to_ptr.hbm [resolvable:$true] %s18
      %s20 = sshll.u32 [#allocation2], 4
      %s21 = int_to_ptr.vmem [resolvable:$true] %s20
      %23 = dma.hbm_to_vmem [thread:$0]  %s19, 64, %s21, [#allocation3]
    $region5: #{tpu_custom_call.1} parent=1 // pred_fallthru
      _
    // Predicated region
    $region6: #{tpu_custom_call.1} parent=1 // pred_check
      _
    $region7: #{tpu_custom_call.1} parent=1 // pred_check_branch
      %25 = sbr.rel (0) target = $region9
    $region8: #{tpu_custom_call.1} parent=1 // pred_region
      %27 = vsyncadd [#allocation6], 0
      %s28 = sshll.u32 %s1, 4
      %s29 = int_to_ptr.hbm [resolvable:$true] %s28
      %s30 = sshll.u32 [#allocation5], 4
      %s31 = int_to_ptr.vmem [resolvable:$true] %s30
      %36 = dma.hbm_to_vmem [thread:$0]  %s29, 2048, %s31, [#allocation6], 128, 128, 8
    $region9: #{tpu_custom_call.1} parent=1 // pred_fallthru
      _
    // Predicated region
    $region10: #{tpu_custom_call.1} parent=1 // pred_check
      _
    $region11: #{tpu_custom_call.1} parent=1 // pred_check_branch
      %38 = sbr.rel (0) target = $region13
    $region12: #{tpu_custom_call.1} parent=1 // pred_region
      _
    $region13: #{tpu_custom_call.1} parent=1 // pred_fallthru
      _
    // Predicated region
    $region14: #{tpu_custom_call.1} parent=1 // pred_check
      _
    $region15: #{tpu_custom_call.1} parent=1 // pred_check_branch
      %40 = sbr.rel (0) target = $region17
    $region16: #{tpu_custom_call.1} parent=1 // pred_region
      %42 = vsyncadd [#allocation6], 0
      %s43 = sshll.u32 %s3, 4
      %s44 = int_to_ptr.hbm [resolvable:$true] %s43
      %s45 = sshll.u32 [#allocation7], 4
      %s46 = int_to_ptr.vmem [resolvable:$true] %s45
      %51 = dma.hbm_to_vmem [thread:$0]  %s44, 2048, %s46, [#allocation6], 128, 128, 8
    $region17: #{tpu_custom_call.1} parent=1 // pred_fallthru
      _
    // Predicated region
    $region18: #{tpu_custom_call.1} parent=1 // pred_check
      _
    $region19: #{tpu_custom_call.1} parent=1 // pred_check_branch
      %53 = sbr.rel (0) target = $region21
    $region20: #{tpu_custom_call.1} parent=1 // pred_region
      _
    $region21: #{tpu_custom_call.1} parent=1 // pred_fallthru
      _
    // Predicated region
    $region22: #{tpu_custom_call.1} parent=1 // pred_check
      _
    $region23: #{tpu_custom_call.1} parent=1 // pred_check_branch
      %55 = sbr.rel (0) target = $region25
    $region24: #{tpu_custom_call.1} parent=1 // pred_region
      %57 = dma.done [#allocation3], 64
    $region25: #{tpu_custom_call.1} parent=1 // pred_fallthru
      _
    // Predicated region
    $region26: #{tpu_custom_call.1} parent=1 // pred_check
      _
    $region27: #{tpu_custom_call.1} parent=1 // pred_check_branch
      %59 = sbr.rel (0) target = $region29
    $region28: #{tpu_custom_call.1} parent=1 // pred_region
      %61 = dma.done [#allocation6], 2048
    $region29: #{tpu_custom_call.1} parent=1 // pred_fallthru
      _
    // Predicated region
    $region30: #{tpu_custom_call.1} parent=1 // pred_check
      _
    $region31: #{tpu_custom_call.1} parent=1 // pred_check_branch
      %63 = sbr.rel (0) target = $region33
    $region32: #{tpu_custom_call.1} parent=1 // pred_region
      %65 = dma.done [#allocation6], 2048
    $region33: #{tpu_custom_call.1} parent=1 // pred_fallthru
      _
    %v66 = vld [vmem:[#allocation2] sm:$0xf]
    %v67 = vld [vmem:[#allocation5] sm:$0xff]
    %v68 = vld [vmem:[#allocation5 + $0x8] sm:$0xff]
    %v69 = vld [vmem:[#allocation5 + $0x10] sm:$0xff]
    %v70 = vld [vmem:[#allocation5 + $0x18] sm:$0xff]
    %v71 = vld [vmem:[#allocation5 + $0x20] sm:$0xff]
    %v72 = vld [vmem:[#allocation5 + $0x28] sm:$0xff]
    %v73 = vld [vmem:[#allocation5 + $0x30] sm:$0xff]
    %v74 = vld [vmem:[#allocation5 + $0x38] sm:$0xff]
    %v75 = vld [vmem:[#allocation5 + $0x40] sm:$0xff]
    %v76 = vld [vmem:[#allocation5 + $0x48] sm:$0xff]
    %v77 = vld [vmem:[#allocation5 + $0x50] sm:$0xff]
    %v78 = vld [vmem:[#allocation5 + $0x58] sm:$0xff]
    %v79 = vld [vmem:[#allocation5 + $0x60] sm:$0xff]
    %v80 = vld [vmem:[#allocation5 + $0x68] sm:$0xff]
    %v81 = vld [vmem:[#allocation5 + $0x70] sm:$0xff]
    %v82 = vld [vmem:[#allocation5 + $0x78] sm:$0xff]
    %v83 = vld [vmem:[%s2] sm:$0x1]
    %v85 = vperm.slane %v83, 0
    %87 = vmatpush.msra.mxu0 %v82
    %88 = vmatpush.msra.mxu0 %v81
    %89 = vmatpush.msra.mxu0 %v80
    %90 = vmatpush.msra.mxu0 %v79
    %91 = vmatpush.msra.mxu0 %v78
    %92 = vmatpush.msra.mxu0 %v77
    %93 = vmatpush.msra.mxu0 %v76
    %94 = vmatpush.msra.mxu0 %v75
    %95 = vmatpush.msra.mxu0 %v74
    %96 = vmatpush.msra.mxu0 %v73
    %97 = vmatpush.msra.mxu0 %v72
    %98 = vmatpush.msra.mxu0 %v71
    %99 = vmatpush.msra.mxu0 %v70
    %100 = vmatpush.msra.mxu0 %v69
    %101 = vmatpush.msra.mxu0 %v68
    %102 = vmatpush.msra.mxu0 %v67
    %103 = vmatmul.f32.gmra.mxu0 %v66
    %v104 = vpop.f32.mrf.mxu0
    %v105 = vadd.f32 %v85, %v104
    %106 = vdwg.mxu0
    %v107 = vmax.f32 %v105, 0.0
    %v108 = vld [vmem:[#allocation7] sm:$0xff]
    %v109 = vld [vmem:[#allocation7 + $0x8] sm:$0xff]
    %v110 = vld [vmem:[#allocation7 + $0x10] sm:$0xff]
    %v111 = vld [vmem:[#allocation7 + $0x18] sm:$0xff]
    %v112 = vld [vmem:[#allocation7 + $0x20] sm:$0xff]
    %v113 = vld [vmem:[#allocation7 + $0x28] sm:$0xff]
    %v114 = vld [vmem:[#allocation7 + $0x30] sm:$0xff]
    %v115 = vld [vmem:[#allocation7 + $0x38] sm:$0xff]
    %v116 = vld [vmem:[#allocation7 + $0x40] sm:$0xff]
    %v117 = vld [vmem:[#allocation7 + $0x48] sm:$0xff]
    %v118 = vld [vmem:[#allocation7 + $0x50] sm:$0xff]
    %v119 = vld [vmem:[#allocation7 + $0x58] sm:$0xff]
    %v120 = vld [vmem:[#allocation7 + $0x60] sm:$0xff]
    %v121 = vld [vmem:[#allocation7 + $0x68] sm:$0xff]
    %v122 = vld [vmem:[#allocation7 + $0x70] sm:$0xff]
    %v123 = vld [vmem:[#allocation7 + $0x78] sm:$0xff]
    %v124 = vld [vmem:[%s4] sm:$0x1]
    %v126 = vperm.slane %v124, 0
    %128 = vmatpush.msra.mxu0 %v123
    %129 = vmatpush.msra.mxu0 %v122
    %130 = vmatpush.msra.mxu0 %v121
    %131 = vmatpush.msra.mxu0 %v120
    %132 = vmatpush.msra.mxu0 %v119
    %133 = vmatpush.msra.mxu0 %v118
    %134 = vmatpush.msra.mxu0 %v117
    %135 = vmatpush.msra.mxu0 %v116
    %136 = vmatpush.msra.mxu0 %v115
    %137 = vmatpush.msra.mxu0 %v114
    %138 = vmatpush.msra.mxu0 %v113
    %139 = vmatpush.msra.mxu0 %v112
    %140 = vmatpush.msra.mxu0 %v111
    %141 = vmatpush.msra.mxu0 %v110
    %142 = vmatpush.msra.mxu0 %v109
    %143 = vmatpush.msra.mxu0 %v108
    %144 = vmatmul.f32.gmra.mxu0 %v107
    %v145 = vpop.f32.mrf.mxu0
    %v146 = vadd.f32 %v126, %v145
    %147 = vdwg.mxu0
    %148 = vst [vmem:[#allocation8] sm:$0xf] %v146
    // Predicated region
    $region34: #{tpu_custom_call.1} parent=1 // pred_check
      _
    $region35: #{tpu_custom_call.1} parent=1 // pred_check_branch
      %150 = sbr.rel (0) target = $region37
    $region36: #{tpu_custom_call.1} parent=1 // pred_region
      %152 = vsyncadd [#allocation4], 0
      %s154 = sshll.u32 [#allocation8], 4
      %s155 = int_to_ptr.vmem [resolvable:$true] %s154
      %s156 = sshll.u32 %s5, 4
      %s157 = int_to_ptr.hbm [resolvable:$true] %s156
      %159 = dma.vmem_to_hbm [thread:$0]  %s155, 64, %s157, [#allocation4]
    $region37: #{tpu_custom_call.1} parent=1 // pred_fallthru
      _
    // Predicated region
    $region38: #{tpu_custom_call.1} parent=1 // pred_check
      _
    $region39: #{tpu_custom_call.1} parent=1 // pred_check_branch
      %161 = sbr.rel (0) target = $region41
    $region40: #{tpu_custom_call.1} parent=1 // pred_region
      %163 = dma.done [#allocation4], 64
    $region41: #{tpu_custom_call.1} parent=1 // pred_fallthru
      _
    %164 = vsyncpa [#allocation3], 1
    %165 = vsyncpa [#allocation6], 1
    %166 = vsyncpa [#allocation4], 1

</llo_original>
